<compile_context>
chip_gen: v5e
topology: v5e:2x2
jax: 0.10.0
libtpu: 0.0.40
codegen_flags: <defaults>
</compile_context>

<pallas_src>
import functools
import math

import jax
import jax.numpy as jnp
from jax import lax
from jax.experimental import pallas as pl
from jax.experimental.pallas import tpu as pltpu


def _round_up(a, b):
    return (a + b - 1) // b * b


def sine_mlp_kernel(x_ref, w1_ref, b1_ref, w2_ref, b2_ref, w3_ref, b3_ref,
                    o_ref, *, chunk_n, matmul_dtype):
    # Hoisted once per grid step; weights are VMEM-resident (constant
    # index_maps) and already in their target dtypes (pre-cast in the wrapper).
    w1 = w1_ref[...]            # (64, 1)  compute dtype
    b1 = b1_ref[...]            # (64, 1)  compute dtype
    w2 = w2_ref[...]            # (64, 64) matmul dtype
    b2 = b2_ref[...]            # (64, 1)  f32
    w3 = w3_ref[...]            # (64, 1)  f32
    b3 = b3_ref[0, 0]           # scalar   f32 (SMEM)

    compute_dtype = w1.dtype
    num_chunks = x_ref.shape[1] // chunk_n   # static; tile % chunk == 0

    def body(c, carry):
        off = pl.multiple_of(c * chunk_n, 128)
        x = x_ref[:, pl.ds(off, chunk_n)].astype(compute_dtype)      # (1, CN)

        # layer 1: Linear(1, 64) + ReLU as a sublane broadcast (64,1)*(1,CN).
        h1 = jnp.maximum(w1 * x + b1, 0)                              # (64, CN)

        # layer 2: Linear(64, 64) + ReLU on the MXU, f32 accumulation.
        h2 = jnp.dot(w2, h1.astype(matmul_dtype),
                     preferred_element_type=jnp.float32)              # (64, CN)
        h2 = jnp.maximum(h2 + b2, 0.0)

        # layer 3: Linear(64, 1) as VPU multiply + 64-deep sublane reduction,
        # written lane-dense into the output tile.
        o_ref[:, pl.ds(off, chunk_n)] = (
            jnp.sum(h2 * w3, axis=0, keepdims=True) + b3)             # (1, CN)
        return carry

    lax.fori_loop(0, num_chunks, body, 0, unroll=True)


def sine_model_forward(x, params, *, tile_n=8192, chunk_n=2048,
                       matmul_dtype=jnp.bfloat16, compute_dtype=jnp.bfloat16):
    """x: (N, 1) float32.  params: torch-layout weights (see init_params).

    tile_n: grid-step (DMA) tile over the batch, multiple of 128.
    chunk_n: inner VPU/MXU sub-chunk (bounds the VMEM working set).
    matmul_dtype: layer-2 MXU input dtype (bf16 everywhere; MXU is bf16 native).
    compute_dtype: layer-1 VPU dtype (bf16 on v6e/v7x, float32 on v5e).
    """
    n = x.shape[0]
    # (N, 1) -> (1, N) is a metadata-only reshape; no pad, no extra HBM pass.
    x_t = x.reshape(1, n).astype(jnp.float32)

    # --- tile / chunk selection (all lane-dense multiples of 128) ------------
    tile_r = _round_up(max(int(tile_n), 128), 128)
    chunk_r = _round_up(max(int(chunk_n), 128), 128)
    chunk = math.gcd(tile_r, min(chunk_r, tile_r))        # divides tile_r, %128==0
    tile = min(tile_r, _round_up(n, chunk))               # don't over-tile tiny N
    if n > chunk:
        # Ensure >= 2 grid steps so v7x's two TensorCores both get work.
        tile = min(tile, max(chunk, _round_up(-(-n // 2), chunk)))
    num_tiles = pl.cdiv(n, tile)                          # ragged tail is masked

    # Pre-cast weights so the kernel never re-casts VMEM-resident params.
    w1 = params["w1t"].astype(compute_dtype)
    b1 = params["b1"].astype(compute_dtype)
    w2 = params["w2t"].astype(matmul_dtype)

    kernel = functools.partial(sine_mlp_kernel, chunk_n=chunk,
                               matmul_dtype=matmul_dtype)

    out_t = pl.pallas_call(
        kernel,
        out_shape=jax.ShapeDtypeStruct((1, n), jnp.float32),
        grid=(num_tiles,),
        in_specs=[
            # batch tile of x (software-pipelined along the grid)
            pl.BlockSpec((1, tile), lambda i: (0, i)),
            # weights / biases: constant block index -> VMEM-resident
            pl.BlockSpec((64, 1), lambda i: (0, 0)),    # w1 (out, in) = (64, 1)
            pl.BlockSpec((64, 1), lambda i: (0, 0)),    # b1 column
            pl.BlockSpec((64, 64), lambda i: (0, 0)),   # w2 (out, in)
            pl.BlockSpec((64, 1), lambda i: (0, 0)),    # b2 column
            pl.BlockSpec((64, 1), lambda i: (0, 0)),    # w3 column (in, 1)
            # scalar layer-3 bias in SMEM
            pl.BlockSpec(memory_space=pltpu.MemorySpace.SMEM),
        ],
        out_specs=pl.BlockSpec((1, tile), lambda i: (0, i)),
        compiler_params=pltpu.CompilerParams(
            dimension_semantics=("parallel",),
            # Explicit VMEM budget with headroom: working set is ~2 MiB
            # (double-buffered I/O tiles + (64, chunk) intermediates), safe on
            # v5e (16 MiB scoped default) and v7x (64 MiB physical).
            vmem_limit_bytes=32 * 1024 * 1024,
        ),
    )(x_t, w1, b1, w2, params["b2"], params["w3t"], params["b3"])

    return out_t.reshape(n, 1)


def init_params(key):
    """Deterministic init mimicking torch.nn.Linear defaults
    (U[-1/sqrt(fan_in), 1/sqrt(fan_in)]).

    Stored layout (feature-major kernel):
      w1t: (64, 1)  == layer1.weight (out, in)
      b1 : (64, 1)
      w2t: (64, 64) == layer2.weight (out, in)
      b2 : (64, 1)
      w3t: (64, 1)  == layer3.weight.T
      b3 : (1, 1)
    """
    ks = jax.random.split(key, 6)

    def lin(kw, kb, fan_in, fan_out):
        bound = 1.0 / jnp.sqrt(jnp.float32(fan_in))
        w = jax.random.uniform(kw, (fan_out, fan_in), jnp.float32, -bound, bound)
        b = jax.random.uniform(kb, (fan_out, 1), jnp.float32, -bound, bound)
        return w, b

    w1, b1 = lin(ks[0], ks[1], 1, 64)
    w2, b2 = lin(ks[2], ks[3], 64, 64)
    w3, b3 = lin(ks[4], ks[5], 64, 1)
    return {"w1t": w1, "b1": b1, "w2t": w2, "b2": b2, "w3t": w3.T, "b3": b3}


def reference_forward(x, p, matmul_dtype=jnp.float32, compute_dtype=jnp.float32):
    """Pure-JAX reference matching torch semantics at selectable precision."""
    hp = jax.lax.Precision.HIGHEST
    cd = compute_dtype
    # layer 1 (fan_in = 1): elementwise broadcast, same ops as the kernel.
    h1 = jnp.maximum(
        x.astype(cd) * p["w1t"].T.astype(cd) + p["b1"].T.astype(cd), 0)
    h2 = jnp.dot(h1.astype(matmul_dtype), p["w2t"].T.astype(matmul_dtype),
                 preferred_element_type=jnp.float32, precision=hp)
    h2 = jnp.maximum(h2 + p["b2"].T, 0.0)
    return jnp.dot(h2, p["w3t"], precision=hp) + p["b3"]


if __name__ == "__main__":
    key = jax.random.PRNGKey(0)
    k_in, k_param = jax.random.split(key)
    params = init_params(k_param)

    # Small, non-tile-aligned batch so multi-step grids and the masked ragged
    # tail are both exercised.
    N = 300
    x = jax.random.uniform(k_in, (N, 1), jnp.float32, -jnp.pi, jnp.pi)

    # 1) f32 everywhere, small tile -> 3 grid steps + ragged tail (torch-exact).
    out_f32 = jax.block_until_ready(
        sine_model_forward(x, params, tile_n=128, chunk_n=128,
                           matmul_dtype=jnp.float32,
                           compute_dtype=jnp.float32))
    ref_f32 = reference_forward(x, params, jnp.float32, jnp.float32)
    assert out_f32.shape == (N, 1)
    assert jnp.allclose(out_f32, ref_f32, atol=1e-4, rtol=1e-4)

    # 2) default perf path (big tile, bf16 layer-1 + bf16 MXU, inner sub-chunk
    #    loop), checked against a matched-precision reference.
    out_bf16 = jax.block_until_ready(sine_model_forward(x, params))
    ref_bf16 = reference_forward(x, params, jnp.bfloat16, jnp.bfloat16)
    assert jnp.allclose(out_bf16, ref_bf16, atol=1e-2, rtol=1e-2)

    # 3) batch smaller than one sub-chunk (single masked block, clamped tile).
    out_small = jax.block_until_ready(
        sine_model_forward(x[:8], params, tile_n=256, chunk_n=2048,
                           matmul_dtype=jnp.float32,
                           compute_dtype=jnp.float32))
    assert jnp.allclose(out_small, ref_f32[:8], atol=1e-4, rtol=1e-4)

    print("KERNEL_OK")
</pallas_src>

<mosaic_0001>
module attributes {stable_mosaic.version = 11 : i64} {
  func.func @sine_mlp_kernel(%arg0: i32, %arg1: memref<1x128xf32, #tpu.memory_space<vmem>>, %arg2: memref<64x1xf32, #tpu.memory_space<vmem>>, %arg3: memref<64x1xf32, #tpu.memory_space<vmem>>, %arg4: memref<64x64xf32, #tpu.memory_space<vmem>>, %arg5: memref<64x1xf32, #tpu.memory_space<vmem>>, %arg6: memref<64x1xf32, #tpu.memory_space<vmem>>, %arg7: memref<1x1xf32, #tpu.memory_space<smem>>, %arg8: memref<1x128xf32, #tpu.memory_space<vmem>>) attributes {dimension_semantics = [#tpu.dimension_semantics<parallel>], iteration_bounds = array<i64: 3>, scalar_prefetch = 0 : i64, scratch_operands = 0 : i64, tpu.core_type = #tpu.core_type<tc>, window_params = [{transform_indices = @transform_0, window_bounds = array<i64: 1, 128>}, {pipeline_mode = #tpu.pipeline_mode<synchronous>, transform_indices = @transform_1, window_bounds = array<i64: 64, 1>}, {pipeline_mode = #tpu.pipeline_mode<synchronous>, transform_indices = @transform_2, window_bounds = array<i64: 64, 1>}, {pipeline_mode = #tpu.pipeline_mode<synchronous>, transform_indices = @transform_3, window_bounds = array<i64: 64, 64>}, {pipeline_mode = #tpu.pipeline_mode<synchronous>, transform_indices = @transform_4, window_bounds = array<i64: 64, 1>}, {pipeline_mode = #tpu.pipeline_mode<synchronous>, transform_indices = @transform_5, window_bounds = array<i64: 64, 1>}, {transform_indices = @transform_6, window_bounds = array<i64: 1, 1>}, {transform_indices = @transform_7, window_bounds = array<i64: 1, 128>}]} {
    %c0 = arith.constant 0 : index
    %c0_0 = arith.constant 0 : index
    %0 = vector.load %arg2[%c0, %c0_0] : memref<64x1xf32, #tpu.memory_space<vmem>>, vector<64x1xf32>
    %c0_1 = arith.constant 0 : index
    %c0_2 = arith.constant 0 : index
    %1 = vector.load %arg3[%c0_1, %c0_2] : memref<64x1xf32, #tpu.memory_space<vmem>>, vector<64x1xf32>
    %c0_3 = arith.constant 0 : index
    %c0_4 = arith.constant 0 : index
    %2 = vector.load %arg4[%c0_3, %c0_4] : memref<64x64xf32, #tpu.memory_space<vmem>>, vector<64x64xf32>
    %c0_5 = arith.constant 0 : index
    %c0_6 = arith.constant 0 : index
    %3 = vector.load %arg5[%c0_5, %c0_6] : memref<64x1xf32, #tpu.memory_space<vmem>>, vector<64x1xf32>
    %c0_7 = arith.constant 0 : index
    %c0_8 = arith.constant 0 : index
    %4 = vector.load %arg6[%c0_7, %c0_8] : memref<64x1xf32, #tpu.memory_space<vmem>>, vector<64x1xf32>
    %c0_9 = arith.constant 0 : index
    %c0_10 = arith.constant 0 : index
    %5 = memref.load %arg7[%c0_9, %c0_10] : memref<1x1xf32, #tpu.memory_space<smem>>
    %c0_i32 = arith.constant 0 : i32
    %c128_i32 = arith.constant 128 : i32
    %6 = arith.muli %c0_i32, %c128_i32 : i32
    %7 = tpu.assume_multiple %6, 128 : i32
    %c0_11 = arith.constant 0 : index
    %8 = arith.index_cast %7 : i32 to index
    %9 = vector.load %arg1[%c0_11, %8] : memref<1x128xf32, #tpu.memory_space<vmem>>, vector<1x128xf32>
    %10 = vector.broadcast %0 : vector<64x1xf32> to vector<64x128xf32>
    %11 = vector.broadcast %9 : vector<1x128xf32> to vector<64x128xf32>
    %12 = arith.mulf %10, %11 : vector<64x128xf32>
    %13 = vector.broadcast %1 : vector<64x1xf32> to vector<64x128xf32>
    %14 = arith.addf %12, %13 : vector<64x128xf32>
    %cst = arith.constant 0.000000e+00 : f32
    %15 = vector.broadcast %cst : f32 to vector<64x128xf32>
    %16 = arith.maximumf %14, %15 : vector<64x128xf32>
    %cst_12 = arith.constant dense<0.000000e+00> : vector<64x128xf32>
    %17 = tpu.matmul %2, %16, %cst_12 {dimension_numbers = #tpu.dot_dimension_numbers<[1], [0], [0], [1], [0, 0, 1, 1], [], []>} : vector<64x64xf32>, vector<64x128xf32>, vector<64x128xf32> -> vector<64x128xf32>
    %18 = vector.broadcast %3 : vector<64x1xf32> to vector<64x128xf32>
    %19 = arith.addf %17, %18 : vector<64x128xf32>
    %cst_13 = arith.constant 0.000000e+00 : f32
    %20 = vector.broadcast %cst_13 : f32 to vector<64x128xf32>
    %21 = arith.maximumf %19, %20 : vector<64x128xf32>
    %22 = vector.broadcast %4 : vector<64x1xf32> to vector<64x128xf32>
    %23 = arith.mulf %21, %22 : vector<64x128xf32>
    %cst_14 = arith.constant dense<0.000000e+00> : vector<128xf32>
    %24 = vector.multi_reduction <add>, %23, %cst_14 [0] : vector<64x128xf32> to vector<128xf32>
    %25 = vector.shape_cast %24 : vector<128xf32> to vector<1x128xf32>
    %26 = vector.broadcast %5 : f32 to vector<1x128xf32>
    %27 = arith.addf %25, %26 : vector<1x128xf32>
    %c0_15 = arith.constant 0 : index
    %28 = arith.index_cast %7 : i32 to index
    %29 = vector.load %arg8[%c0_15, %28] : memref<1x128xf32, #tpu.memory_space<vmem>>, vector<1x128xf32>
    tpu.vector_store %arg8[%c0_15, %28], %27 {strides = array<i32>} : memref<1x128xf32, #tpu.memory_space<vmem>>, vector<1x128xf32>,
    %c1_i32 = arith.constant 1 : i32
    return
  }
  func.func @transform_0(%arg0: i32) -> (i32, i32) {
    %c0_i32 = arith.constant 0 : i32
    %c0_i32_0 = arith.constant 0 : i32
    return %c0_i32, %arg0 : i32, i32
  }
  func.func @transform_1(%arg0: i32) -> (i32, i32) {
    %c0_i32 = arith.constant 0 : i32
    %c0_i32_0 = arith.constant 0 : i32
    %c0_i32_1 = arith.constant 0 : i32
    return %c0_i32, %c0_i32_0 : i32, i32
  }
  func.func @transform_2(%arg0: i32) -> (i32, i32) {
    %c0_i32 = arith.constant 0 : i32
    %c0_i32_0 = arith.constant 0 : i32
    %c0_i32_1 = arith.constant 0 : i32
    return %c0_i32, %c0_i32_0 : i32, i32
  }
  func.func @transform_3(%arg0: i32) -> (i32, i32) {
    %c0_i32 = arith.constant 0 : i32
    %c0_i32_0 = arith.constant 0 : i32
    %c0_i32_1 = arith.constant 0 : i32
    return %c0_i32, %c0_i32_0 : i32, i32
  }
  func.func @transform_4(%arg0: i32) -> (i32, i32) {
    %c0_i32 = arith.constant 0 : i32
    %c0_i32_0 = arith.constant 0 : i32
    %c0_i32_1 = arith.constant 0 : i32
    return %c0_i32, %c0_i32_0 : i32, i32
  }
  func.func @transform_5(%arg0: i32) -> (i32, i32) {
    %c0_i32 = arith.constant 0 : i32
    %c0_i32_0 = arith.constant 0 : i32
    %c0_i32_1 = arith.constant 0 : i32
    return %c0_i32, %c0_i32_0 : i32, i32
  }
  func.func @transform_6(%arg0: i32) -> (i32, i32) {
    %c0_i32 = arith.constant 0 : i32
    %c0_i32_0 = arith.constant 0 : i32
    %c0_i32_1 = arith.constant 0 : i32
    return %c0_i32, %c0_i32_0 : i32, i32
  }
  func.func @transform_7(%arg0: i32) -> (i32, i32) {
    %c0_i32 = arith.constant 0 : i32
    %c0_i32_0 = arith.constant 0 : i32
    return %c0_i32, %arg0 : i32, i32
  }
}

</mosaic_0001>

<llo_original>
// kernel: tpu_custom_call.1
$region0: #{tpu_custom_call.1}
  #allocation0 [shape = 'u32[]', space=smem, size = 0x4, offset = 0x4, fixed_abs, tag = 'smem constant byte address 0x4 - core index']
  #allocation1 [shape = 'u32[72,128]{1,0:T(1,128)}', space=vmem, size = 0x9000, scoped, tag = 'internal scratch']
  #allocation2 [shape = 'f32[1,1]{1,0:T(1,128)S(6)}', space=smem, size = 0x200, scoped, tag = 'scoped memory for tpu_custom_call.1']
  %s0 = inlined_call_operand.vmem [shape: f32[1,300], index: 0, kind: input, shape index: {}]
  %s1 = inlined_call_operand.vmem [shape: f32[64,1], index: 1, kind: input, shape index: {}]
  %s2 = inlined_call_operand.vmem [shape: f32[64,1], index: 2, kind: input, shape index: {}]
  %s3 = inlined_call_operand.vmem [shape: f32[64,64], index: 3, kind: input, shape index: {}]
  %s4 = inlined_call_operand.vmem [shape: f32[64,1], index: 4, kind: input, shape index: {}]
  %s5 = inlined_call_operand.vmem [shape: f32[64,1], index: 5, kind: input, shape index: {}]
  %s6 = inlined_call_operand.<no memory space> [shape: f32[1,1], index: 6, kind: input, shape index: {}]
  %s7 = inlined_call_operand.hbm [shape: f32[1,300], index: 7, kind: output, shape index: {}]
  %s8 = sld [smem:[#allocation0]]
  $region61: #{tpu_custom_call.1} parent=0
    _
  %s10 = ssub.s32 1, %s8
  %s11 = scalar_select 0, %s10, %s8
  %12 = sst [smem:[#allocation2]] %s6
  $region1: #{tpu_custom_call.1} parent=0
    #allocation3 [shape = 'u8[1024]{0}', space=vmem, size = 0x400, scoped, tag = 'output window, operand 0']
    #allocation4 [shape = 's32[2]{0}', space=sflag, size = 0x8, scoped, tag = 'scoped memory for tpu_custom_call.1']
    %13 = vsyncpa [#allocation4], 0
    %s14 = scalar_lea.sflag [#allocation4], 1
    %15 = vsyncpa %s14, 0
    loop: start=0, step=1, limit=5
    $region2: #{tpu_custom_call.1} parent=1 // loop_pre_header
      _
    $region3: #{tpu_custom_call.1} parent=1 // loop_header
      %s17 = sphi 0, %s21
      %p18 = scmp.ge.s32.totalorder %s17, 5
      %s27 = sphi 0, %s29
      %s30 = sphi 0, %s27
      %s31 = sphi 0, %s30
      %s47 = sphi 0, %s31
      %s51 = sphi 0, %s51
      %s53 = sphi 0, %s51
      %s54 = sphi 0, %s53
      %s68 = sphi 0, %s54
      %s72 = sphi 0, %s72
      %s74 = sphi 0, %s72
      %s75 = sphi 0, %s74
      %s89 = sphi 0, %s75
      %s93 = sphi 0, %s93
      %s95 = sphi 0, %s93
      %s96 = sphi 0, %s95
      %s110 = sphi 0, %s96
      %s114 = sphi 0, %s114
      %s116 = sphi 0, %s114
      %s117 = sphi 0, %s116
      %s131 = sphi 0, %s117
      %s135 = sphi 0, %s135
      %s137 = sphi 0, %s135
      %s138 = sphi 0, %s137
      %s152 = sphi 0, %s138
      %s156 = sphi 0, %s156
      %s158 = sphi 0, %s156
      %s159 = sphi 0, %s158
      %s173 = sphi 0, %s159
      %s179 = sphi 0, %s181
      %s182 = sphi 0, %s179
      %s183 = sphi 0, %s182
      %s199 = sphi 0, %s183
    $region4: #{tpu_custom_call.1} parent=1 // loop_header_branch
      %20 = sbr.rel (%p18) target = $region8
    $region5: #{tpu_custom_call.1} parent=1 // loop_body
      %s22 = ssub.s32 %s17, 1
      %s23 = ssub.s32 %s17, 2
      %s24 = sadd.s32 %s17, 1
      %s25 = ssub.s32 %s17, %s24
      %p26 = scmp.eq.s32.totalorder %s25, 0
      %s28 = sadd.s32 %s27, 1
      %s29 = scalar_select %p26, %s27, %s28
      %p32 = pneg %p26
      %p33 = scmp.eq.s32.totalorder %s17, 2
      %p34 = por %p32, %p33
      %p35 = scmp.ne.s32.totalorder %s27, %s30
      %p36 = scmp.eq.s32.totalorder %s17, 0
      %p37 = por %p35, %p36
      %p38 = scmp.ne.s32.totalorder %s27, %s30
      %p39 = scmp.eq.s32.totalorder %s22, 2
      %p40 = por %p38, %p39
      %p41 = scmp.ne.s32.totalorder %s30, %s31
      %p42 = scmp.eq.s32.totalorder %s22, 0
      %p43 = por %p41, %p42
      %p44 = scmp.ne.s32.totalorder %s30, %s31
      %p45 = scmp.eq.s32.totalorder %s23, 2
      %p46 = por %p44, %p45
      %p48 = scmp.ne.s32.totalorder %s31, %s47
      %p49 = scmp.eq.s32.totalorder %s23, 0
      %p50 = por %p48, %p49
      %s52 = sadd.s32 %s51, 1
      %p55 = scmp.eq.s32.totalorder %s17, 2
      %p56 = scmp.ne.s32.totalorder %s51, %s53
      %p57 = scmp.eq.s32.totalorder %s17, 0
      %p58 = por %p56, %p57
      %p59 = scmp.ne.s32.totalorder %s51, %s53
      %p60 = scmp.eq.s32.totalorder %s22, 2
      %p61 = por %p59, %p60
      %p62 = scmp.ne.s32.totalorder %s53, %s54
      %p63 = scmp.eq.s32.totalorder %s22, 0
      %p64 = por %p62, %p63
      %p65 = scmp.ne.s32.totalorder %s53, %s54
      %p66 = scmp.eq.s32.totalorder %s23, 2
      %p67 = por %p65, %p66
      %p69 = scmp.ne.s32.totalorder %s54, %s68
      %p70 = scmp.eq.s32.totalorder %s23, 0
      %p71 = por %p69, %p70
      %s73 = sadd.s32 %s72, 1
      %p76 = scmp.eq.s32.totalorder %s17, 2
      %p77 = scmp.ne.s32.totalorder %s72, %s74
      %p78 = scmp.eq.s32.totalorder %s17, 0
      %p79 = por %p77, %p78
      %p80 = scmp.ne.s32.totalorder %s72, %s74
      %p81 = scmp.eq.s32.totalorder %s22, 2
      %p82 = por %p80, %p81
      %p83 = scmp.ne.s32.totalorder %s74, %s75
      %p84 = scmp.eq.s32.totalorder %s22, 0
      %p85 = por %p83, %p84
      %p86 = scmp.ne.s32.totalorder %s74, %s75
      %p87 = scmp.eq.s32.totalorder %s23, 2
      %p88 = por %p86, %p87
      %p90 = scmp.ne.s32.totalorder %s75, %s89
      %p91 = scmp.eq.s32.totalorder %s23, 0
      %p92 = por %p90, %p91
      %s94 = sadd.s32 %s93, 1
      %p97 = scmp.eq.s32.totalorder %s17, 2
      %p98 = scmp.ne.s32.totalorder %s93, %s95
      %p99 = scmp.eq.s32.totalorder %s17, 0
      %p100 = por %p98, %p99
      %p101 = scmp.ne.s32.totalorder %s93, %s95
      %p102 = scmp.eq.s32.totalorder %s22, 2
      %p103 = por %p101, %p102
      %p104 = scmp.ne.s32.totalorder %s95, %s96
      %p105 = scmp.eq.s32.totalorder %s22, 0
      %p106 = por %p104, %p105
      %p107 = scmp.ne.s32.totalorder %s95, %s96
      %p108 = scmp.eq.s32.totalorder %s23, 2
      %p109 = por %p107, %p108
      %p111 = scmp.ne.s32.totalorder %s96, %s110
      %p112 = scmp.eq.s32.totalorder %s23, 0
      %p113 = por %p111, %p112
      %s115 = sadd.s32 %s114, 1
      %p118 = scmp.eq.s32.totalorder %s17, 2
      %p119 = scmp.ne.s32.totalorder %s114, %s116
      %p120 = scmp.eq.s32.totalorder %s17, 0
      %p121 = por %p119, %p120
      %p122 = scmp.ne.s32.totalorder %s114, %s116
      %p123 = scmp.eq.s32.totalorder %s22, 2
      %p124 = por %p122, %p123
      %p125 = scmp.ne.s32.totalorder %s116, %s117
      %p126 = scmp.eq.s32.totalorder %s22, 0
      %p127 = por %p125, %p126
      %p128 = scmp.ne.s32.totalorder %s116, %s117
      %p129 = scmp.eq.s32.totalorder %s23, 2
      %p130 = por %p128, %p129
      %p132 = scmp.ne.s32.totalorder %s117, %s131
      %p133 = scmp.eq.s32.totalorder %s23, 0
      %p134 = por %p132, %p133
      %s136 = sadd.s32 %s135, 1
      %p139 = scmp.eq.s32.totalorder %s17, 2
      %p140 = scmp.ne.s32.totalorder %s135, %s137
      %p141 = scmp.eq.s32.totalorder %s17, 0
      %p142 = por %p140, %p141
      %p143 = scmp.ne.s32.totalorder %s135, %s137
      %p144 = scmp.eq.s32.totalorder %s22, 2
      %p145 = por %p143, %p144
      %p146 = scmp.ne.s32.totalorder %s137, %s138
      %p147 = scmp.eq.s32.totalorder %s22, 0
      %p148 = por %p146, %p147
      %p149 = scmp.ne.s32.totalorder %s137, %s138
      %p150 = scmp.eq.s32.totalorder %s23, 2
      %p151 = por %p149, %p150
      %p153 = scmp.ne.s32.totalorder %s138, %s152
      %p154 = scmp.eq.s32.totalorder %s23, 0
      %p155 = por %p153, %p154
      %s157 = sadd.s32 %s156, 1
      %p160 = scmp.eq.s32.totalorder %s17, 2
      %p161 = scmp.ne.s32.totalorder %s156, %s158
      %p162 = scmp.eq.s32.totalorder %s17, 0
      %p163 = por %p161, %p162
      %p164 = scmp.ne.s32.totalorder %s156, %s158
      %p165 = scmp.eq.s32.totalorder %s22, 2
      %p166 = por %p164, %p165
      %p167 = scmp.ne.s32.totalorder %s158, %s159
      %p168 = scmp.eq.s32.totalorder %s22, 0
      %p169 = por %p167, %p168
      %p170 = scmp.ne.s32.totalorder %s158, %s159
      %p171 = scmp.eq.s32.totalorder %s23, 2
      %p172 = por %p170, %p171
      %p174 = scmp.ne.s32.totalorder %s159, %s173
      %p175 = scmp.eq.s32.totalorder %s23, 0
      %p176 = por %p174, %p175
      %s177 = ssub.s32 %s17, %s24
      %p178 = scmp.eq.s32.totalorder %s177, 0
      %s180 = sadd.s32 %s179, 1
      %s181 = scalar_select %p178, %s179, %s180
      %p184 = pneg %p178
      %p185 = scmp.eq.s32.totalorder %s17, 2
      %p186 = por %p184, %p185
      %p187 = scmp.ne.s32.totalorder %s179, %s182
      %p188 = scmp.eq.s32.totalorder %s17, 0
      %p189 = por %p187, %p188
      %p190 = scmp.ne.s32.totalorder %s179, %s182
      %p191 = scmp.eq.s32.totalorder %s22, 2
      %p192 = por %p190, %p191
      %p193 = scmp.ne.s32.totalorder %s182, %s183
      %p194 = scmp.eq.s32.totalorder %s22, 0
      %p195 = por %p193, %p194
      %p196 = scmp.ne.s32.totalorder %s182, %s183
      %p197 = scmp.eq.s32.totalorder %s23, 2
      %p198 = por %p196, %p197
      %p200 = scmp.ne.s32.totalorder %s183, %s199
      %p201 = scmp.eq.s32.totalorder %s23, 0
      %p202 = por %p200, %p201
      %p203 = scmp.le.s32.totalorder 1, %s17
      %p204 = scmp.lt.s32.totalorder %s17, 4
      %p205 = pnand %p203, %p204
      %p206 = pneg %p205
      // Predicated region
      $region9: #{tpu_custom_call.1} parent=5 // pred_check
        _
      $region10: #{tpu_custom_call.1} parent=5 // pred_check_branch
        %208 = sbr.rel (%p205) target = $region12
      $region11: #{tpu_custom_call.1} parent=5 // pred_region
        %s209 = ssub.s32 %s17, 1
        // Predicated region
        $region13: #{tpu_custom_call.1} parent=11 // pred_check
          %p210 = pneg %p64
        $region14: #{tpu_custom_call.1} parent=11 // pred_check_branch
          %212 = sbr.rel (%p210) target = $region16
        $region15: #{tpu_custom_call.1} parent=11 // pred_region
          _
        $region16: #{tpu_custom_call.1} parent=11 // pred_fallthru
          _
        // Predicated region
        $region17: #{tpu_custom_call.1} parent=11 // pred_check
          %p213 = pneg %p85
        $region18: #{tpu_custom_call.1} parent=11 // pred_check_branch
          %215 = sbr.rel (%p213) target = $region20
        $region19: #{tpu_custom_call.1} parent=11 // pred_region
          _
        $region20: #{tpu_custom_call.1} parent=11 // pred_fallthru
          _
        // Predicated region
        $region21: #{tpu_custom_call.1} parent=11 // pred_check
          %p216 = pneg %p106
        $region22: #{tpu_custom_call.1} parent=11 // pred_check_branch
          %218 = sbr.rel (%p216) target = $region24
        $region23: #{tpu_custom_call.1} parent=11 // pred_region
          _
        $region24: #{tpu_custom_call.1} parent=11 // pred_fallthru
          _
        // Predicated region
        $region25: #{tpu_custom_call.1} parent=11 // pred_check
          %p219 = pneg %p127
        $region26: #{tpu_custom_call.1} parent=11 // pred_check_branch
          %221 = sbr.rel (%p219) target = $region28
        $region27: #{tpu_custom_call.1} parent=11 // pred_region
          _
        $region28: #{tpu_custom_call.1} parent=11 // pred_fallthru
          _
        // Predicated region
        $region29: #{tpu_custom_call.1} parent=11 // pred_check
          %p222 = pneg %p148
        $region30: #{tpu_custom_call.1} parent=11 // pred_check_branch
          %224 = sbr.rel (%p222) target = $region32
        $region31: #{tpu_custom_call.1} parent=11 // pred_region
          _
        $region32: #{tpu_custom_call.1} parent=11 // pred_fallthru
          _
        // Predicated region
        $region33: #{tpu_custom_call.1} parent=11 // pred_check
          %p225 = pneg %p169
        $region34: #{tpu_custom_call.1} parent=11 // pred_check_branch
          %227 = sbr.rel (%p225) target = $region36
        $region35: #{tpu_custom_call.1} parent=11 // pred_region
          _
        $region36: #{tpu_custom_call.1} parent=11 // pred_fallthru
          _
      $region12: #{tpu_custom_call.1} parent=5 // pred_fallthru
        _
      %p228 = scmp.lt.s32.totalorder %s17, 3
      // Predicated region
      $region37: #{tpu_custom_call.1} parent=5 // pred_check
        %p229 = pneg %p228
      $region38: #{tpu_custom_call.1} parent=5 // pred_check_branch
        %231 = sbr.rel (%p229) target = $region40
      $region39: #{tpu_custom_call.1} parent=5 // pred_region
        // Predicated region
        $region41: #{tpu_custom_call.1} parent=39 // pred_check
          %p232 = pneg %p37
        $region42: #{tpu_custom_call.1} parent=39 // pred_check_branch
          %234 = sbr.rel (%p232) target = $region44
        $region43: #{tpu_custom_call.1} parent=39 // pred_region
          %p235 = scmp.lt.s32.totalorder %s17, 2
          %s236 = scalar_select %p235, %s17, 2
          %s237 = scalar_lea.vmem %s0, %s236
        $region44: #{tpu_custom_call.1} parent=39 // pred_fallthru
          _
      $region40: #{tpu_custom_call.1} parent=5 // pred_fallthru
        _
      %p238 = scmp.le.s32.totalorder 1, %s17
      %p239 = scmp.lt.s32.totalorder %s17, 4
      %p240 = pnand %p238, %p239
      %p241 = pneg %p240
      // Predicated region
      $region45: #{tpu_custom_call.1} parent=5 // pred_check
        _
      $region46: #{tpu_custom_call.1} parent=5 // pred_check_branch
        %243 = sbr.rel (%p240) target = $region48
      $region47: #{tpu_custom_call.1} parent=5 // pred_region
        %s244 = ssub.s32 %s17, 1
        %p245 = scmp.lt.s32.totalorder %s22, 2
        %s246 = scalar_select %p245, %s22, 2
        %s247 = scalar_lea.vmem %s0, %s246
        %p248 = pneg %p43
        %p249 = pneg %p40
        %p250 = pneg %p64
        %p251 = pneg %p61
        %p252 = pneg %p85
        %p253 = pneg %p82
        %p254 = pneg %p106
        %p255 = pneg %p103
        %p256 = pneg %p127
        %p257 = pneg %p124
        %p258 = pneg %p148
        %p259 = pneg %p145
        %p260 = pneg %p169
        %p261 = pneg %p166
        %p262 = pneg %p195
        %p263 = pneg %p192
        %s264 = sand.u32 %s182, 1
        %s265 = scalar_lea.sflag [#allocation4], %s264
        %s266 = sand.u32 %s182, 1
        %s267 = scalar_lea.vmem [#allocation3], %s266
        %p268 = scmp.lt.s32.totalorder %s22, 2
        %s269 = scalar_select %p268, %s22, 2
        %s270 = scalar_lea.vmem %s0, %s269
        %v271 = vld [vmem:[%s1] sm:$0xff]
        %v272 = vld [vmem:[%s1 + $0x8] sm:$0xff]
        %v273 = vld [vmem:[%s1 + $0x10] sm:$0xff]
        %v274 = vld [vmem:[%s1 + $0x18] sm:$0xff]
        %v275 = vld [vmem:[%s1 + $0x20] sm:$0xff]
        %v276 = vld [vmem:[%s1 + $0x28] sm:$0xff]
        %v277 = vld [vmem:[%s1 + $0x30] sm:$0xff]
        %v278 = vld [vmem:[%s1 + $0x38] sm:$0xff]
        %v279 = vld [vmem:[%s2] sm:$0xff]
        %v280 = vld [vmem:[%s2 + $0x8] sm:$0xff]
        %v281 = vld [vmem:[%s2 + $0x10] sm:$0xff]
        %v282 = vld [vmem:[%s2 + $0x18] sm:$0xff]
        %v283 = vld [vmem:[%s2 + $0x20] sm:$0xff]
        %v284 = vld [vmem:[%s2 + $0x28] sm:$0xff]
        %v285 = vld [vmem:[%s2 + $0x30] sm:$0xff]
        %v286 = vld [vmem:[%s2 + $0x38] sm:$0xff]
        %v287 = vld [vmem:[%s3] sm:$0xff]
        %v288 = vld [vmem:[%s3 + $0x8] sm:$0xff]
        %v289 = vld [vmem:[%s3 + $0x10] sm:$0xff]
        %v290 = vld [vmem:[%s3 + $0x18] sm:$0xff]
        %v291 = vld [vmem:[%s3 + $0x20] sm:$0xff]
        %v292 = vld [vmem:[%s3 + $0x28] sm:$0xff]
        %v293 = vld [vmem:[%s3 + $0x30] sm:$0xff]
        %v294 = vld [vmem:[%s3 + $0x38] sm:$0xff]
        %v295 = vld [vmem:[%s4] sm:$0xff]
        %v296 = vld [vmem:[%s4 + $0x8] sm:$0xff]
        %v297 = vld [vmem:[%s4 + $0x10] sm:$0xff]
        %v298 = vld [vmem:[%s4 + $0x18] sm:$0xff]
        %v299 = vld [vmem:[%s4 + $0x20] sm:$0xff]
        %v300 = vld [vmem:[%s4 + $0x28] sm:$0xff]
        %v301 = vld [vmem:[%s4 + $0x30] sm:$0xff]
        %v302 = vld [vmem:[%s4 + $0x38] sm:$0xff]
        %v303 = vld [vmem:[%s5] sm:$0xff]
        %v304 = vld [vmem:[%s5 + $0x8] sm:$0xff]
        %v305 = vld [vmem:[%s5 + $0x10] sm:$0xff]
        %v306 = vld [vmem:[%s5 + $0x18] sm:$0xff]
        %v307 = vld [vmem:[%s5 + $0x20] sm:$0xff]
        %v308 = vld [vmem:[%s5 + $0x28] sm:$0xff]
        %v309 = vld [vmem:[%s5 + $0x30] sm:$0xff]
        %v310 = vld [vmem:[%s5 + $0x38] sm:$0xff]
        %s311 = sld [smem:[#allocation2]]
        %v312 = vld [vmem:[%s270] sm:$0x1]
        %314 = vset.pattern.permute.xlu0 0
        %315 = vperm.xlu0 %314, %v271
        %v316 = vpop.permute.xlu0 %315
        %319 = vset.pattern.permute.xlu0 0
        %320 = vperm.xlu0 %319, %v272
        %v321 = vpop.permute.xlu0 %320
        %324 = vset.pattern.permute.xlu0 0
        %325 = vperm.xlu0 %324, %v273
        %v326 = vpop.permute.xlu0 %325
        %329 = vset.pattern.permute.xlu0 0
        %330 = vperm.xlu0 %329, %v274
        %v331 = vpop.permute.xlu0 %330
        %334 = vset.pattern.permute.xlu0 0
        %335 = vperm.xlu0 %334, %v275
        %v336 = vpop.permute.xlu0 %335
        %339 = vset.pattern.permute.xlu0 0
        %340 = vperm.xlu0 %339, %v276
        %v341 = vpop.permute.xlu0 %340
        %344 = vset.pattern.permute.xlu0 0
        %345 = vperm.xlu0 %344, %v277
        %v346 = vpop.permute.xlu0 %345
        %349 = vset.pattern.permute.xlu0 0
        %350 = vperm.xlu0 %349, %v278
        %v351 = vpop.permute.xlu0 %350
        %v354 = vperm.slane %v312, 0
        %v356 = vmul.f32 %v316, %v354
        %v357 = vmul.f32 %v321, %v354
        %v358 = vmul.f32 %v326, %v354
        %v359 = vmul.f32 %v331, %v354
        %v360 = vmul.f32 %v336, %v354
        %v361 = vmul.f32 %v341, %v354
        %v362 = vmul.f32 %v346, %v354
        %v363 = vmul.f32 %v351, %v354
        %365 = vset.pattern.permute.xlu0 0
        %366 = vperm.xlu0 %365, %v279
        %v367 = vpop.permute.xlu0 %366
        %370 = vset.pattern.permute.xlu0 0
        %371 = vperm.xlu0 %370, %v280
        %v372 = vpop.permute.xlu0 %371
        %375 = vset.pattern.permute.xlu0 0
        %376 = vperm.xlu0 %375, %v281
        %v377 = vpop.permute.xlu0 %376
        %380 = vset.pattern.permute.xlu0 0
        %381 = vperm.xlu0 %380, %v282
        %v382 = vpop.permute.xlu0 %381
        %385 = vset.pattern.permute.xlu0 0
        %386 = vperm.xlu0 %385, %v283
        %v387 = vpop.permute.xlu0 %386
        %390 = vset.pattern.permute.xlu0 0
        %391 = vperm.xlu0 %390, %v284
        %v392 = vpop.permute.xlu0 %391
        %395 = vset.pattern.permute.xlu0 0
        %396 = vperm.xlu0 %395, %v285
        %v397 = vpop.permute.xlu0 %396
        %400 = vset.pattern.permute.xlu0 0
        %401 = vperm.xlu0 %400, %v286
        %v402 = vpop.permute.xlu0 %401
        %v404 = vadd.f32 %v356, %v367
        %v405 = vadd.f32 %v357, %v372
        %v406 = vadd.f32 %v358, %v377
        %v407 = vadd.f32 %v359, %v382
        %v408 = vadd.f32 %v360, %v387
        %v409 = vadd.f32 %v361, %v392
        %v410 = vadd.f32 %v362, %v397
        %v411 = vadd.f32 %v363, %v402
        %v412 = vmax.f32 %v404, 0.0
        %v413 = vmax.f32 %v405, 0.0
        %v414 = vmax.f32 %v406, 0.0
        %v415 = vmax.f32 %v407, 0.0
        %v416 = vmax.f32 %v408, 0.0
        %v417 = vmax.f32 %v409, 0.0
        %v418 = vmax.f32 %v410, 0.0
        %v419 = vmax.f32 %v411, 0.0
        %421 = vset.pattern.permute.xlu0 0
        %422 = vperm.xlu0 %421, %v295
        %v423 = vpop.permute.xlu0 %422
        %426 = vset.pattern.permute.xlu0 0
        %427 = vperm.xlu0 %426, %v296
        %v428 = vpop.permute.xlu0 %427
        %431 = vset.pattern.permute.xlu0 0
        %432 = vperm.xlu0 %431, %v297
        %v433 = vpop.permute.xlu0 %432
        %436 = vset.pattern.permute.xlu0 0
        %437 = vperm.xlu0 %436, %v298
        %v438 = vpop.permute.xlu0 %437
        %441 = vset.pattern.permute.xlu0 0
        %442 = vperm.xlu0 %441, %v299
        %v443 = vpop.permute.xlu0 %442
        %446 = vset.pattern.permute.xlu0 0
        %447 = vperm.xlu0 %446, %v300
        %v448 = vpop.permute.xlu0 %447
        %451 = vset.pattern.permute.xlu0 0
        %452 = vperm.xlu0 %451, %v301
        %v453 = vpop.permute.xlu0 %452
        %456 = vset.pattern.permute.xlu0 0
        %457 = vperm.xlu0 %456, %v302
        %v458 = vpop.permute.xlu0 %457
        %vm460 = vcmask 523264
        %v462 = vsel %vm460, %v287, 0
        %v465 = vsel %vm460, %v288, 0
        %v468 = vsel %vm460, %v289, 0
        %v471 = vsel %vm460, %v290, 0
        %v474 = vsel %vm460, %v291, 0
        %v477 = vsel %vm460, %v292, 0
        %v480 = vsel %vm460, %v293, 0
        %v483 = vsel %vm460, %v294, 0
        %485 = vmatpush.msra.mxu0 0.0
        %486 = vmatpush.msra.mxu0 0.0
        %487 = vmatpush.msra.mxu0 0.0
        %488 = vmatpush.msra.mxu0 0.0
        %489 = vmatpush.msra.mxu0 0.0
        %490 = vmatpush.msra.mxu0 0.0
        %491 = vmatpush.msra.mxu0 0.0
        %492 = vmatpush.msra.mxu0 0.0
        %493 = vmatpush.msra.mxu0 %v419
        %494 = vmatpush.msra.mxu0 %v418
        %495 = vmatpush.msra.mxu0 %v417
        %496 = vmatpush.msra.mxu0 %v416
        %497 = vmatpush.msra.mxu0 %v415
        %498 = vmatpush.msra.mxu0 %v414
        %499 = vmatpush.msra.mxu0 %v413
        %500 = vmatpush.msra.mxu0 %v412
        %501 = vmatmul.f32.gmra.mxu0 %v462
        %v502 = vpop.f32.mrf.mxu0
        %v503 = vadd.f32 %v423, %v502
        %504 = vmatmul.f32.gmra.mxu0 %v465
        %v505 = vpop.f32.mrf.mxu0
        %v506 = vadd.f32 %v428, %v505
        %507 = vmatmul.f32.gmra.mxu0 %v468
        %v508 = vpop.f32.mrf.mxu0
        %v509 = vadd.f32 %v433, %v508
        %510 = vmatmul.f32.gmra.mxu0 %v471
        %v511 = vpop.f32.mrf.mxu0
        %v512 = vadd.f32 %v438, %v511
        %513 = vmatmul.f32.gmra.mxu0 %v474
        %v514 = vpop.f32.mrf.mxu0
        %v515 = vadd.f32 %v443, %v514
        %516 = vmatmul.f32.gmra.mxu0 %v477
        %v517 = vpop.f32.mrf.mxu0
        %v518 = vadd.f32 %v448, %v517
        %519 = vmatmul.f32.gmra.mxu0 %v480
        %v520 = vpop.f32.mrf.mxu0
        %v521 = vadd.f32 %v453, %v520
        %522 = vmatmul.f32.gmra.mxu0 %v483
        %v523 = vpop.f32.mrf.mxu0
        %v524 = vadd.f32 %v458, %v523
        %525 = vdwg.mxu0
        %v526 = vmax.f32 %v503, 0.0
        %v527 = vmax.f32 %v506, 0.0
        %v528 = vmax.f32 %v509, 0.0
        %v529 = vmax.f32 %v512, 0.0
        %v530 = vmax.f32 %v515, 0.0
        %v531 = vmax.f32 %v518, 0.0
        %v532 = vmax.f32 %v521, 0.0
        %v533 = vmax.f32 %v524, 0.0
        %535 = vset.pattern.permute.xlu0 0
        %536 = vperm.xlu0 %535, %v303
        %v537 = vpop.permute.xlu0 %536
        %540 = vset.pattern.permute.xlu0 0
        %541 = vperm.xlu0 %540, %v304
        %v542 = vpop.permute.xlu0 %541
        %545 = vset.pattern.permute.xlu0 0
        %546 = vperm.xlu0 %545, %v305
        %v547 = vpop.permute.xlu0 %546
        %550 = vset.pattern.permute.xlu0 0
        %551 = vperm.xlu0 %550, %v306
        %v552 = vpop.permute.xlu0 %551
        %555 = vset.pattern.permute.xlu0 0
        %556 = vperm.xlu0 %555, %v307
        %v557 = vpop.permute.xlu0 %556
        %560 = vset.pattern.permute.xlu0 0
        %561 = vperm.xlu0 %560, %v308
        %v562 = vpop.permute.xlu0 %561
        %565 = vset.pattern.permute.xlu0 0
        %566 = vperm.xlu0 %565, %v309
        %v567 = vpop.permute.xlu0 %566
        %570 = vset.pattern.permute.xlu0 0
        %571 = vperm.xlu0 %570, %v310
        %v572 = vpop.permute.xlu0 %571
        %v574 = vmul.f32 %v526, %v537
        %v575 = vmul.f32 %v527, %v542
        %v576 = vmul.f32 %v528, %v547
        %v577 = vmul.f32 %v529, %v552
        %v578 = vmul.f32 %v530, %v557
        %v579 = vmul.f32 %v531, %v562
        %v580 = vmul.f32 %v532, %v567
        %v581 = vmul.f32 %v533, %v572
        %v582 = vadd.f32 %v574, %v575
        %v583 = vadd.f32 %v582, %v576
        %v584 = vadd.f32 %v583, %v577
        %v585 = vadd.f32 %v584, %v578
        %v586 = vadd.f32 %v585, %v579
        %v587 = vadd.f32 %v586, %v580
        %v588 = vadd.f32 %v587, %v581
        %v589 = vrot.slane %v588, 4
        %v590 = vadd.f32 %v588, %v589
        %v591 = vrot.slane %v590, 2
        %v592 = vadd.f32 %v590, %v591
        %v593 = vrot.slane %v592, 1
        %v594 = vadd.f32 %v592, %v593
        %v595 = vstv %s311
        %v596 = vadd.f32 %v594, %v595
        %597 = vst [vmem:[%s267] sm:$0x1] %v596
        %s598 = sand.u32 %s182, 1
        %s599 = scalar_lea.sflag [#allocation4], %s598
        %s600 = sand.u32 %s182, 1
        %s601 = scalar_lea.vmem [#allocation3], %s600
        // Predicated region
        $region49: #{tpu_custom_call.1} parent=47 // pred_check
          %p602 = pneg %p192
        $region50: #{tpu_custom_call.1} parent=47 // pred_check_branch
          %604 = sbr.rel (%p602) target = $region52
        $region51: #{tpu_custom_call.1} parent=47 // pred_region
          %606 = vsyncadd %s599, 0
          %s607 = scalar_lea.hbm %s7, %s22
          %s609 = sshll.u32 %s601, 4
          %s610 = int_to_ptr.vmem [resolvable:$true] %s609
          %s611 = sshll.u32 %s607, 4
          %s612 = int_to_ptr.hbm [resolvable:$true] %s611
          %614 = dma.vmem_to_hbm [thread:$0]  %s610, 16, %s612, %s599
        $region52: #{tpu_custom_call.1} parent=47 // pred_fallthru
          _
      $region48: #{tpu_custom_call.1} parent=5 // pred_fallthru
        _
      %p615 = scmp.le.s32.totalorder 2, %s17
      // Predicated region
      $region53: #{tpu_custom_call.1} parent=5 // pred_check
        %p616 = pneg %p615
      $region54: #{tpu_custom_call.1} parent=5 // pred_check_branch
        %618 = sbr.rel (%p616) target = $region56
      $region55: #{tpu_custom_call.1} parent=5 // pred_region
        %s619 = ssub.s32 %s17, 2
        // Predicated region
        $region57: #{tpu_custom_call.1} parent=55 // pred_check
          %p620 = pneg %p198
        $region58: #{tpu_custom_call.1} parent=55 // pred_check_branch
          %622 = sbr.rel (%p620) target = $region60
        $region59: #{tpu_custom_call.1} parent=55 // pred_region
          %s623 = sand.u32 %s183, 1
          %s624 = scalar_lea.sflag [#allocation4], %s623
          %s625 = sand.u32 %s183, 1
          %s626 = scalar_lea.vmem [#allocation3], %s625
          %628 = dma.done %s624, 16
        $region60: #{tpu_custom_call.1} parent=55 // pred_fallthru
          _
      $region56: #{tpu_custom_call.1} parent=5 // pred_fallthru
        _
    $region6: #{tpu_custom_call.1} parent=1 // loop_footer
      %s21 = sadd.s32 1, %s17
    $region7: #{tpu_custom_call.1} parent=1 // loop_footer_branch
      %16 = sbr.rel target = $region3
    $region8: #{tpu_custom_call.1} parent=1 // loop_exit
      _
    %629 = vsyncpa [#allocation4], 1
    %s630 = scalar_lea.sflag [#allocation4], 1
    %631 = vsyncpa %s630, 1

</llo_original>
